<compile_context>
chip_gen: v7x
topology: tpu7x:2x2x1
jax: 0.10.0
libtpu: 0.0.40
codegen_flags: <defaults>
</compile_context>

<pallas_src>
import functools

import jax
import jax.numpy as jnp
from jax.experimental import pallas as pl
from jax.experimental.pallas import tpu as pltpu

_EPS = 1e-6


def _make_kernel(D: int, depth_min: float, delta: float, side_flag: float):
    """Kernel over one (batch, HW-tile) block.

    Refs (all VMEM):
      atten_ref  : (1, D, TILE)    depth-attention, lane-dense along HW
      planes_ref : (1, S, 3, TILE) per-plane ray·normal components
      pd_ref     : (1, S, 1)       per-plane offsets
      out_ref    : (1, S, TILE)
    """
    inv_delta = 1.0 / float(delta)

    def kernel(atten_ref, planes_ref, pd_ref, out_ref):
        a = atten_ref[0]                      # (D, TILE)
        p = planes_ref[0]                     # (S, 3, TILE)
        pd = pd_ref[0]                        # (S, 1)

        # Fused plane-depth computation (formerly an XLA-level HBM round trip).
        denom = jnp.sum(p, axis=1)            # (S, TILE)
        safe = jnp.where(jnp.abs(denom) < _EPS,
                         jnp.where(denom < 0.0, jnp.float32(-_EPS), jnp.float32(_EPS)),
                         denom)               # sign-preserving clamp near zero
        t = pd / safe                         # (S, TILE)
        if side_flag != 0.0:                  # dead path: module hard-codes 0.0
            sgn = jnp.float32(1.0 if side_flag > 0.0 else -1.0)
            t = jnp.where(jnp.sign(denom) == sgn, t, jnp.float32(1e9))

        acc = jnp.zeros(t.shape, jnp.float32)
        # D is small & static here -> full unroll.  gamma baked in as constants.
        # TODO(synk): for large production D (>=32) switch to a bounded-unroll
        # lax.fori_loop (or the 2-adjacent-bin closed form) to limit vreg pressure.
        for d in range(D):
            g = depth_min + d * delta         # compile-time python float
            w = jnp.maximum(0.0, 1.0 - jnp.abs(t - g) * inv_delta)   # (S, TILE)
            acc = acc + w * a[d:d + 1, :]     # (1, TILE) stride-0 sublane broadcast
        out_ref[0] = acc

    return kernel


def _pick_tile(HW: int, B: int) -> int:
    """Largest lane-friendly tile that still leaves >=8 grid iterations (v7x has
    2 TensorCores sharing the parallel grid); falls back gracefully for tiny HW."""
    candidates = (2048, 1024, 512, 256, 128)
    divisors = [t for t in candidates if HW % t == 0]
    if not divisors:
        return HW                 # full-row block (block dim == array dim is legal)
    for t in divisors:            # descending
        if B * (HW // t) >= 8:
            return t
    return divisors[0]            # tiny problem: fewest grid steps wins


@functools.partial(jax.jit,
                   static_argnames=("depth_min", "depth_max", "side_flag", "tile"))
def img2sphere_forward(atten, planes, planes_d, *, depth_min, depth_max,
                       side_flag=0.0, tile=512):
    B, HW, D = atten.shape
    _, S, C, _ = planes.shape
    assert HW % tile == 0, "HW must be divisible by the HW tile size"

    delta = (depth_max - depth_min) / (D - 1) if D > 1 else 1.0

    # Lane-dense atten layout: (B, D, HW).  Contiguous DMA per tile; the per-d
    # row read in the kernel is then a cheap sublane broadcast.
    atten_t = jnp.transpose(atten.astype(jnp.float32), (0, 2, 1))
    planes_f = planes.astype(jnp.float32)
    pd = planes_d.astype(jnp.float32).reshape(B, S, 1)

    kernel = _make_kernel(D, float(depth_min), float(delta), float(side_flag))

    out = pl.pallas_call(
        kernel,
        out_shape=jax.ShapeDtypeStruct((B, S, HW), jnp.float32),
        grid_spec=pltpu.PrefetchScalarGridSpec(
            num_scalar_prefetch=0,
            grid=(B, HW // tile),
            in_specs=[
                pl.BlockSpec((1, D, tile), lambda b, i: (b, 0, i)),     # atten (B,D,HW)
                pl.BlockSpec((1, S, C, tile), lambda b, i: (b, 0, 0, i)),  # planes
                pl.BlockSpec((1, S, 1), lambda b, i: (b, 0, 0)),        # planes_d
            ],
            out_specs=pl.BlockSpec((1, S, tile), lambda b, i: (b, 0, i)),
        ),
        compiler_params=pltpu.CompilerParams(
            dimension_semantics=("parallel", "parallel")),
        # Per-block VMEM (<~0.5 MiB double-buffered even at tile=2048) fits the
        # default scoped limit on v5e/v6e/v7x; no vmem_limit_bytes override needed.
    )(atten_t, planes_f, pd)
    return out


class IMG2SPHERE:
    """JAX/Pallas port of the PyTorch IMG2SPHERE module (forward only)."""

    def __init__(self, D, depth_min, depth_max, side_flag=0.0):
        self.D = D
        self.depth_min = float(depth_min)
        self.depth_max = float(depth_max)
        # NOTE: the PyTorch __init__ hard-codes self.side_flag = 0.0 regardless
        # of the constructor argument; we reproduce that.
        self.side_flag = 0.0
        self.gamma = jnp.linspace(depth_min, depth_max, D, dtype=jnp.float32)

    def __call__(self, atten, planes, planes_d):
        B, HW, _ = atten.shape
        tile = _pick_tile(HW, B)
        return img2sphere_forward(
            atten, planes, planes_d,
            depth_min=self.depth_min, depth_max=self.depth_max,
            side_flag=self.side_flag, tile=tile)


def _reference(atten, planes, planes_d, depth_min, depth_max, side_flag):
    """Pure-JAX reference with identical numerics (same eps handling / gamma)."""
    B, HW, D = atten.shape
    delta = (depth_max - depth_min) / (D - 1) if D > 1 else 1.0
    gamma = depth_min + jnp.arange(D, dtype=jnp.float32) * jnp.float32(delta)
    denom = jnp.sum(planes, axis=2)                                   # (B,S,HW)
    safe = jnp.where(jnp.abs(denom) < _EPS,
                     jnp.where(denom < 0.0, -_EPS, _EPS), denom)
    t = planes_d[:, :, None] / safe                                   # (B,S,HW)
    if side_flag != 0.0:
        sgn = 1.0 if side_flag > 0.0 else -1.0
        t = jnp.where(jnp.sign(denom) == sgn, t, 1e9)
    w = jnp.maximum(0.0, 1.0 - jnp.abs(t[..., None] - gamma) / delta)  # (B,S,HW,D)
    return jnp.einsum("bshd,bhd->bsh", w, atten)


if __name__ == "__main__":
    key = jax.random.PRNGKey(0)
    B, H, W, D, S = 2, 16, 16, 8, 4
    HW = H * W
    depth_min, depth_max = 0.5, 4.0

    k1, k2, k3 = jax.random.split(key, 3)
    # per-pixel attention over D depth hypotheses
    atten = jax.nn.softmax(jax.random.normal(k1, (B, HW, D), dtype=jnp.float32), axis=-1)
    # plane geometry (constants in the original module's backward)
    planes = jax.random.normal(k2, (B, S, 3, HW), dtype=jnp.float32)
    planes_d = jax.random.uniform(k3, (B, S), minval=depth_min, maxval=depth_max,
                                  dtype=jnp.float32)

    mod = IMG2SPHERE(D, depth_min, depth_max, side_flag=0.0)
    out = mod(atten, planes, planes_d)
    out = jax.block_until_ready(out)

    ref = _reference(atten, planes, planes_d, depth_min, depth_max, mod.side_flag)
    assert out.shape == (B, S, HW)
    assert jnp.allclose(out, ref, atol=1e-5, rtol=1e-5), "mismatch vs JAX reference"
    print("KERNEL_OK")
</pallas_src>

<mosaic_0001>
module attributes {stable_mosaic.version = 11 : i64} {
  func.func @kernel(%arg0: i32, %arg1: i32, %arg2: memref<1x8x256xf32, #tpu.memory_space<vmem>>, %arg3: memref<1x4x3x256xf32, #tpu.memory_space<vmem>>, %arg4: memref<1x4x1xf32, #tpu.memory_space<vmem>>, %arg5: memref<1x4x256xf32, #tpu.memory_space<vmem>>) attributes {dimension_semantics = [#tpu.dimension_semantics<parallel>, #tpu.dimension_semantics<parallel>], iteration_bounds = array<i64: 2, 1>, scalar_prefetch = 0 : i64, scratch_operands = 0 : i64, tpu.core_type = #tpu.core_type<tc>, window_params = [{transform_indices = @transform_0, window_bounds = array<i64: 1, 8, 256>}, {transform_indices = @transform_1, window_bounds = array<i64: 1, 4, 3, 256>}, {transform_indices = @transform_2, window_bounds = array<i64: 1, 4, 1>}, {transform_indices = @transform_3, window_bounds = array<i64: 1, 4, 256>}]} {
    %c0 = arith.constant 0 : index
    %c0_0 = arith.constant 0 : index
    %c0_1 = arith.constant 0 : index
    %0 = vector.load %arg2[%c0, %c0_0, %c0_1] : memref<1x8x256xf32, #tpu.memory_space<vmem>>, vector<1x8x256xf32>
    %1 = vector.shape_cast %0 : vector<1x8x256xf32> to vector<8x256xf32>
    %c0_2 = arith.constant 0 : index
    %c0_3 = arith.constant 0 : index
    %c0_4 = arith.constant 0 : index
    %c0_5 = arith.constant 0 : index
    %2 = vector.load %arg3[%c0_2, %c0_3, %c0_4, %c0_5] : memref<1x4x3x256xf32, #tpu.memory_space<vmem>>, vector<1x4x3x256xf32>
    %3 = vector.shape_cast %2 : vector<1x4x3x256xf32> to vector<4x3x256xf32>
    %c0_6 = arith.constant 0 : index
    %c0_7 = arith.constant 0 : index
    %c0_8 = arith.constant 0 : index
    %4 = vector.load %arg4[%c0_6, %c0_7, %c0_8] : memref<1x4x1xf32, #tpu.memory_space<vmem>>, vector<1x4x1xf32>
    %5 = vector.shape_cast %4 : vector<1x4x1xf32> to vector<4x1xf32>
    %cst = arith.constant dense<0.000000e+00> : vector<4x256xf32>
    %6 = vector.multi_reduction <add>, %3, %cst [1] : vector<4x3x256xf32> to vector<4x256xf32>
    %7 = math.absf %6 : vector<4x256xf32>
    %cst_9 = arith.constant 9.99999997E-7 : f32
    %8 = vector.broadcast %cst_9 : f32 to vector<4x256xf32>
    %9 = arith.cmpf olt, %7, %8 : vector<4x256xf32>
    %cst_10 = arith.constant 0.000000e+00 : f32
    %10 = vector.broadcast %cst_10 : f32 to vector<4x256xf32>
    %11 = arith.cmpf olt, %6, %10 : vector<4x256xf32>
    %cst_11 = arith.constant -9.99999997E-7 : f32
    %cst_12 = arith.constant 9.99999997E-7 : f32
    %12 = vector.broadcast %cst_11 : f32 to vector<4x256xf32>
    %13 = vector.broadcast %cst_12 : f32 to vector<4x256xf32>
    %14 = arith.select %11, %12, %13 : vector<4x256xi1>, vector<4x256xf32>
    %15 = arith.select %9, %14, %6 : vector<4x256xi1>, vector<4x256xf32>
    %16 = vector.broadcast %5 : vector<4x1xf32> to vector<4x256xf32>
    %17 = arith.divf %16, %15 : vector<4x256xf32>
    %cst_13 = arith.constant 0.000000e+00 : f32
    %18 = vector.broadcast %cst_13 : f32 to vector<4x256xf32>
    %cst_14 = arith.constant 5.000000e-01 : f32
    %19 = vector.broadcast %cst_14 : f32 to vector<4x256xf32>
    %20 = arith.subf %17, %19 : vector<4x256xf32>
    %21 = math.absf %20 : vector<4x256xf32>
    %cst_15 = arith.constant 2.000000e+00 : f32
    %22 = vector.broadcast %cst_15 : f32 to vector<4x256xf32>
    %23 = arith.mulf %21, %22 : vector<4x256xf32>
    %cst_16 = arith.constant 1.000000e+00 : f32
    %24 = vector.broadcast %cst_16 : f32 to vector<4x256xf32>
    %25 = arith.subf %24, %23 : vector<4x256xf32>
    %cst_17 = arith.constant 0.000000e+00 : f32
    %26 = vector.broadcast %cst_17 : f32 to vector<4x256xf32>
    %27 = arith.maximumf %26, %25 : vector<4x256xf32>
    %28 = vector.extract_strided_slice %1 {offsets = [0, 0], sizes = [1, 256], strides = [1, 1]} : vector<8x256xf32> to vector<1x256xf32>
    %29 = vector.broadcast %28 : vector<1x256xf32> to vector<4x256xf32>
    %30 = arith.mulf %27, %29 : vector<4x256xf32>
    %31 = arith.addf %18, %30 : vector<4x256xf32>
    %cst_18 = arith.constant 1.000000e+00 : f32
    %32 = vector.broadcast %cst_18 : f32 to vector<4x256xf32>
    %33 = arith.subf %17, %32 : vector<4x256xf32>
    %34 = math.absf %33 : vector<4x256xf32>
    %cst_19 = arith.constant 2.000000e+00 : f32
    %35 = vector.broadcast %cst_19 : f32 to vector<4x256xf32>
    %36 = arith.mulf %34, %35 : vector<4x256xf32>
    %cst_20 = arith.constant 1.000000e+00 : f32
    %37 = vector.broadcast %cst_20 : f32 to vector<4x256xf32>
    %38 = arith.subf %37, %36 : vector<4x256xf32>
    %cst_21 = arith.constant 0.000000e+00 : f32
    %39 = vector.broadcast %cst_21 : f32 to vector<4x256xf32>
    %40 = arith.maximumf %39, %38 : vector<4x256xf32>
    %41 = vector.extract_strided_slice %1 {offsets = [1, 0], sizes = [1, 256], strides = [1, 1]} : vector<8x256xf32> to vector<1x256xf32>
    %42 = vector.broadcast %41 : vector<1x256xf32> to vector<4x256xf32>
    %43 = arith.mulf %40, %42 : vector<4x256xf32>
    %44 = arith.addf %31, %43 : vector<4x256xf32>
    %cst_22 = arith.constant 1.500000e+00 : f32
    %45 = vector.broadcast %cst_22 : f32 to vector<4x256xf32>
    %46 = arith.subf %17, %45 : vector<4x256xf32>
    %47 = math.absf %46 : vector<4x256xf32>
    %cst_23 = arith.constant 2.000000e+00 : f32
    %48 = vector.broadcast %cst_23 : f32 to vector<4x256xf32>
    %49 = arith.mulf %47, %48 : vector<4x256xf32>
    %cst_24 = arith.constant 1.000000e+00 : f32
    %50 = vector.broadcast %cst_24 : f32 to vector<4x256xf32>
    %51 = arith.subf %50, %49 : vector<4x256xf32>
    %cst_25 = arith.constant 0.000000e+00 : f32
    %52 = vector.broadcast %cst_25 : f32 to vector<4x256xf32>
    %53 = arith.maximumf %52, %51 : vector<4x256xf32>
    %54 = vector.extract_strided_slice %1 {offsets = [2, 0], sizes = [1, 256], strides = [1, 1]} : vector<8x256xf32> to vector<1x256xf32>
    %55 = vector.broadcast %54 : vector<1x256xf32> to vector<4x256xf32>
    %56 = arith.mulf %53, %55 : vector<4x256xf32>
    %57 = arith.addf %44, %56 : vector<4x256xf32>
    %cst_26 = arith.constant 2.000000e+00 : f32
    %58 = vector.broadcast %cst_26 : f32 to vector<4x256xf32>
    %59 = arith.subf %17, %58 : vector<4x256xf32>
    %60 = math.absf %59 : vector<4x256xf32>
    %cst_27 = arith.constant 2.000000e+00 : f32
    %61 = vector.broadcast %cst_27 : f32 to vector<4x256xf32>
    %62 = arith.mulf %60, %61 : vector<4x256xf32>
    %cst_28 = arith.constant 1.000000e+00 : f32
    %63 = vector.broadcast %cst_28 : f32 to vector<4x256xf32>
    %64 = arith.subf %63, %62 : vector<4x256xf32>
    %cst_29 = arith.constant 0.000000e+00 : f32
    %65 = vector.broadcast %cst_29 : f32 to vector<4x256xf32>
    %66 = arith.maximumf %65, %64 : vector<4x256xf32>
    %67 = vector.extract_strided_slice %1 {offsets = [3, 0], sizes = [1, 256], strides = [1, 1]} : vector<8x256xf32> to vector<1x256xf32>
    %68 = vector.broadcast %67 : vector<1x256xf32> to vector<4x256xf32>
    %69 = arith.mulf %66, %68 : vector<4x256xf32>
    %70 = arith.addf %57, %69 : vector<4x256xf32>
    %cst_30 = arith.constant 2.500000e+00 : f32
    %71 = vector.broadcast %cst_30 : f32 to vector<4x256xf32>
    %72 = arith.subf %17, %71 : vector<4x256xf32>
    %73 = math.absf %72 : vector<4x256xf32>
    %cst_31 = arith.constant 2.000000e+00 : f32
    %74 = vector.broadcast %cst_31 : f32 to vector<4x256xf32>
    %75 = arith.mulf %73, %74 : vector<4x256xf32>
    %cst_32 = arith.constant 1.000000e+00 : f32
    %76 = vector.broadcast %cst_32 : f32 to vector<4x256xf32>
    %77 = arith.subf %76, %75 : vector<4x256xf32>
    %cst_33 = arith.constant 0.000000e+00 : f32
    %78 = vector.broadcast %cst_33 : f32 to vector<4x256xf32>
    %79 = arith.maximumf %78, %77 : vector<4x256xf32>
    %80 = vector.extract_strided_slice %1 {offsets = [4, 0], sizes = [1, 256], strides = [1, 1]} : vector<8x256xf32> to vector<1x256xf32>
    %81 = vector.broadcast %80 : vector<1x256xf32> to vector<4x256xf32>
    %82 = arith.mulf %79, %81 : vector<4x256xf32>
    %83 = arith.addf %70, %82 : vector<4x256xf32>
    %cst_34 = arith.constant 3.000000e+00 : f32
    %84 = vector.broadcast %cst_34 : f32 to vector<4x256xf32>
    %85 = arith.subf %17, %84 : vector<4x256xf32>
    %86 = math.absf %85 : vector<4x256xf32>
    %cst_35 = arith.constant 2.000000e+00 : f32
    %87 = vector.broadcast %cst_35 : f32 to vector<4x256xf32>
    %88 = arith.mulf %86, %87 : vector<4x256xf32>
    %cst_36 = arith.constant 1.000000e+00 : f32
    %89 = vector.broadcast %cst_36 : f32 to vector<4x256xf32>
    %90 = arith.subf %89, %88 : vector<4x256xf32>
    %cst_37 = arith.constant 0.000000e+00 : f32
    %91 = vector.broadcast %cst_37 : f32 to vector<4x256xf32>
    %92 = arith.maximumf %91, %90 : vector<4x256xf32>
    %93 = vector.extract_strided_slice %1 {offsets = [5, 0], sizes = [1, 256], strides = [1, 1]} : vector<8x256xf32> to vector<1x256xf32>
    %94 = vector.broadcast %93 : vector<1x256xf32> to vector<4x256xf32>
    %95 = arith.mulf %92, %94 : vector<4x256xf32>
    %96 = arith.addf %83, %95 : vector<4x256xf32>
    %cst_38 = arith.constant 3.500000e+00 : f32
    %97 = vector.broadcast %cst_38 : f32 to vector<4x256xf32>
    %98 = arith.subf %17, %97 : vector<4x256xf32>
    %99 = math.absf %98 : vector<4x256xf32>
    %cst_39 = arith.constant 2.000000e+00 : f32
    %100 = vector.broadcast %cst_39 : f32 to vector<4x256xf32>
    %101 = arith.mulf %99, %100 : vector<4x256xf32>
    %cst_40 = arith.constant 1.000000e+00 : f32
    %102 = vector.broadcast %cst_40 : f32 to vector<4x256xf32>
    %103 = arith.subf %102, %101 : vector<4x256xf32>
    %cst_41 = arith.constant 0.000000e+00 : f32
    %104 = vector.broadcast %cst_41 : f32 to vector<4x256xf32>
    %105 = arith.maximumf %104, %103 : vector<4x256xf32>
    %106 = vector.extract_strided_slice %1 {offsets = [6, 0], sizes = [1, 256], strides = [1, 1]} : vector<8x256xf32> to vector<1x256xf32>
    %107 = vector.broadcast %106 : vector<1x256xf32> to vector<4x256xf32>
    %108 = arith.mulf %105, %107 : vector<4x256xf32>
    %109 = arith.addf %96, %108 : vector<4x256xf32>
    %cst_42 = arith.constant 4.000000e+00 : f32
    %110 = vector.broadcast %cst_42 : f32 to vector<4x256xf32>
    %111 = arith.subf %17, %110 : vector<4x256xf32>
    %112 = math.absf %111 : vector<4x256xf32>
    %cst_43 = arith.constant 2.000000e+00 : f32
    %113 = vector.broadcast %cst_43 : f32 to vector<4x256xf32>
    %114 = arith.mulf %112, %113 : vector<4x256xf32>
    %cst_44 = arith.constant 1.000000e+00 : f32
    %115 = vector.broadcast %cst_44 : f32 to vector<4x256xf32>
    %116 = arith.subf %115, %114 : vector<4x256xf32>
    %cst_45 = arith.constant 0.000000e+00 : f32
    %117 = vector.broadcast %cst_45 : f32 to vector<4x256xf32>
    %118 = arith.maximumf %117, %116 : vector<4x256xf32>
    %119 = vector.extract_strided_slice %1 {offsets = [7, 0], sizes = [1, 256], strides = [1, 1]} : vector<8x256xf32> to vector<1x256xf32>
    %120 = vector.broadcast %119 : vector<1x256xf32> to vector<4x256xf32>
    %121 = arith.mulf %118, %120 : vector<4x256xf32>
    %122 = arith.addf %109, %121 : vector<4x256xf32>
    %c0_46 = arith.constant 0 : index
    %c0_47 = arith.constant 0 : index
    %c0_48 = arith.constant 0 : index
    %123 = vector.load %arg5[%c0_46, %c0_47, %c0_48] : memref<1x4x256xf32, #tpu.memory_space<vmem>>, vector<1x4x256xf32>
    %124 = vector.shape_cast %123 : vector<1x4x256xf32> to vector<4x256xf32>
    %125 = vector.shape_cast %122 : vector<4x256xf32> to vector<1x4x256xf32>
    tpu.vector_store %arg5[%c0_46, %c0_47, %c0_48], %125 {strides = array<i32>} : memref<1x4x256xf32, #tpu.memory_space<vmem>>, vector<1x4x256xf32>,
    return
  }
  func.func @transform_0(%arg0: i32, %arg1: i32) -> (i32, i32, i32) {
    %c0_i32 = arith.constant 0 : i32
    %c0_i32_0 = arith.constant 0 : i32
    return %arg0, %c0_i32, %arg1 : i32, i32, i32
  }
  func.func @transform_1(%arg0: i32, %arg1: i32) -> (i32, i32, i32, i32) {
    %c0_i32 = arith.constant 0 : i32
    %c0_i32_0 = arith.constant 0 : i32
    %c0_i32_1 = arith.constant 0 : i32
    return %arg0, %c0_i32, %c0_i32_0, %arg1 : i32, i32, i32, i32
  }
  func.func @transform_2(%arg0: i32, %arg1: i32) -> (i32, i32, i32) {
    %c0_i32 = arith.constant 0 : i32
    %c0_i32_0 = arith.constant 0 : i32
    %c0_i32_1 = arith.constant 0 : i32
    return %arg0, %c0_i32, %c0_i32_0 : i32, i32, i32
  }
  func.func @transform_3(%arg0: i32, %arg1: i32) -> (i32, i32, i32) {
    %c0_i32 = arith.constant 0 : i32
    %c0_i32_0 = arith.constant 0 : i32
    return %arg0, %c0_i32, %arg1 : i32, i32, i32
  }
}

</mosaic_0001>

<llo_original>
// kernel: img2sphere_forward.1
$region0: #{img2sphere_forward.1}
  #allocation0 [shape = 'u32[]', space=smem, size = 0x4, offset = 0x4, fixed_abs, tag = 'smem constant byte address 0x4 - core index']
  #allocation1 [shape = 'u32[144,128]{1,0:T(1,128)}', space=vmem, size = 0x12000, scoped, tag = 'internal scratch']
  %s0 = inlined_call_operand.vmem [shape: f32[2,8,256], index: 0, kind: input, shape index: {}]
  %s1 = inlined_call_operand.vmem [shape: f32[2,4,3,256], index: 1, kind: input, shape index: {}]
  %s2 = inlined_call_operand.vmem [shape: f32[2,4,1], index: 2, kind: input, shape index: {}]
  %s3 = inlined_call_operand.hbm [shape: f32[2,4,256], index: 3, kind: output, shape index: {}]
  %s4 = sld [smem:[#allocation0]]
  $region45: #{img2sphere_forward.1} parent=0
    _
  %s6 = ssub.s32 1, %s4
  %s7 = scalar_select 0, %s6, %s4
  $region1: #{img2sphere_forward.1} parent=0
    #allocation2 [shape = 'u8[8192]{0}', space=vmem, size = 0x2000, scoped, tag = 'output window, operand 0']
    #allocation3 [shape = 's32[2]{0}', space=sflag, size = 0x8, scoped, tag = 'scoped memory for img2sphere_forward.1']
    %8 = vsyncpa [#allocation3], 0
    %s9 = scalar_lea.sflag [#allocation3], 1
    %10 = vsyncpa %s9, 0
    loop: start=0, step=1, limit=4
    $region2: #{img2sphere_forward.1} parent=1 // loop_pre_header
      _
    $region3: #{img2sphere_forward.1} parent=1 // loop_header
      %s12 = sphi 0, %s16
      %p13 = scmp.ge.s32.totalorder %s12, 4
      %s19 = sphi 0, %s31
      %s20 = sphi 0, %s27
      %s21 = sphi 0, %s19
      %s22 = sphi 0, %s20
      %s23 = sphi 0, %s21
      %s24 = sphi 0, %s22
      %s36 = sphi 0, %s38
      %s39 = sphi 0, %s36
      %s40 = sphi 0, %s39
      %s56 = sphi 0, %s40
      %s64 = sphi 0, %s66
      %s67 = sphi 0, %s64
      %s68 = sphi 0, %s67
      %s84 = sphi 0, %s68
      %s90 = sphi 0, %s92
      %s93 = sphi 0, %s90
      %s94 = sphi 0, %s93
      %s110 = sphi 0, %s94
      %s118 = sphi 0, %s120
      %s121 = sphi 0, %s118
      %s122 = sphi 0, %s121
      %s138 = sphi 0, %s122
    $region4: #{img2sphere_forward.1} parent=1 // loop_header_branch
      %15 = sbr.rel (%p13) target = $region8
    $region5: #{img2sphere_forward.1} parent=1 // loop_body
      %s17 = ssub.s32 %s12, 1
      %s18 = ssub.s32 %s12, 2
      %s25 = sadd.s32 1, %s20
      %p26 = scmp.ge.s32.totalorder %s25, 1
      %s27 = scalar_select %p26, 0, %s25
      %s28 = sadd.s32 1, %s19
      %s29 = scalar_select %p26, %s28, %s19
      %p30 = scmp.ge.s32.totalorder %s29, 2
      %s31 = scalar_select %p30, 0, %s29
      %s32 = ssub.s32 %s19, %s31
      %s33 = ssub.s32 %s20, %s27
      %s34 = sor.u32 %s32, %s33
      %p35 = scmp.eq.s32.totalorder %s34, 0
      %s37 = sadd.s32 %s36, 1
      %s38 = scalar_select %p35, %s36, %s37
      %p41 = pneg %p35
      %p42 = scmp.eq.s32.totalorder %s12, 1
      %p43 = por %p41, %p42
      %p44 = scmp.ne.s32.totalorder %s36, %s39
      %p45 = scmp.eq.s32.totalorder %s12, 0
      %p46 = por %p44, %p45
      %p47 = scmp.ne.s32.totalorder %s36, %s39
      %p48 = scmp.eq.s32.totalorder %s17, 1
      %p49 = por %p47, %p48
      %p50 = scmp.ne.s32.totalorder %s39, %s40
      %p51 = scmp.eq.s32.totalorder %s17, 0
      %p52 = por %p50, %p51
      %p53 = scmp.ne.s32.totalorder %s39, %s40
      %p54 = scmp.eq.s32.totalorder %s18, 1
      %p55 = por %p53, %p54
      %p57 = scmp.ne.s32.totalorder %s40, %s56
      %p58 = scmp.eq.s32.totalorder %s18, 0
      %p59 = por %p57, %p58
      %s60 = ssub.s32 %s19, %s31
      %s61 = ssub.s32 %s20, %s27
      %s62 = sor.u32 %s60, %s61
      %p63 = scmp.eq.s32.totalorder %s62, 0
      %s65 = sadd.s32 %s64, 1
      %s66 = scalar_select %p63, %s64, %s65
      %p69 = pneg %p63
      %p70 = scmp.eq.s32.totalorder %s12, 1
      %p71 = por %p69, %p70
      %p72 = scmp.ne.s32.totalorder %s64, %s67
      %p73 = scmp.eq.s32.totalorder %s12, 0
      %p74 = por %p72, %p73
      %p75 = scmp.ne.s32.totalorder %s64, %s67
      %p76 = scmp.eq.s32.totalorder %s17, 1
      %p77 = por %p75, %p76
      %p78 = scmp.ne.s32.totalorder %s67, %s68
      %p79 = scmp.eq.s32.totalorder %s17, 0
      %p80 = por %p78, %p79
      %p81 = scmp.ne.s32.totalorder %s67, %s68
      %p82 = scmp.eq.s32.totalorder %s18, 1
      %p83 = por %p81, %p82
      %p85 = scmp.ne.s32.totalorder %s68, %s84
      %p86 = scmp.eq.s32.totalorder %s18, 0
      %p87 = por %p85, %p86
      %s88 = ssub.s32 %s19, %s31
      %p89 = scmp.eq.s32.totalorder %s88, 0
      %s91 = sadd.s32 %s90, 1
      %s92 = scalar_select %p89, %s90, %s91
      %p95 = pneg %p89
      %p96 = scmp.eq.s32.totalorder %s12, 1
      %p97 = por %p95, %p96
      %p98 = scmp.ne.s32.totalorder %s90, %s93
      %p99 = scmp.eq.s32.totalorder %s12, 0
      %p100 = por %p98, %p99
      %p101 = scmp.ne.s32.totalorder %s90, %s93
      %p102 = scmp.eq.s32.totalorder %s17, 1
      %p103 = por %p101, %p102
      %p104 = scmp.ne.s32.totalorder %s93, %s94
      %p105 = scmp.eq.s32.totalorder %s17, 0
      %p106 = por %p104, %p105
      %p107 = scmp.ne.s32.totalorder %s93, %s94
      %p108 = scmp.eq.s32.totalorder %s18, 1
      %p109 = por %p107, %p108
      %p111 = scmp.ne.s32.totalorder %s94, %s110
      %p112 = scmp.eq.s32.totalorder %s18, 0
      %p113 = por %p111, %p112
      %s114 = ssub.s32 %s19, %s31
      %s115 = ssub.s32 %s20, %s27
      %s116 = sor.u32 %s114, %s115
      %p117 = scmp.eq.s32.totalorder %s116, 0
      %s119 = sadd.s32 %s118, 1
      %s120 = scalar_select %p117, %s118, %s119
      %p123 = pneg %p117
      %p124 = scmp.eq.s32.totalorder %s12, 1
      %p125 = por %p123, %p124
      %p126 = scmp.ne.s32.totalorder %s118, %s121
      %p127 = scmp.eq.s32.totalorder %s12, 0
      %p128 = por %p126, %p127
      %p129 = scmp.ne.s32.totalorder %s118, %s121
      %p130 = scmp.eq.s32.totalorder %s17, 1
      %p131 = por %p129, %p130
      %p132 = scmp.ne.s32.totalorder %s121, %s122
      %p133 = scmp.eq.s32.totalorder %s17, 0
      %p134 = por %p132, %p133
      %p135 = scmp.ne.s32.totalorder %s121, %s122
      %p136 = scmp.eq.s32.totalorder %s18, 1
      %p137 = por %p135, %p136
      %p139 = scmp.ne.s32.totalorder %s122, %s138
      %p140 = scmp.eq.s32.totalorder %s18, 0
      %p141 = por %p139, %p140
      %p142 = scmp.le.s32.totalorder 1, %s12
      %p143 = scmp.lt.s32.totalorder %s12, 3
      %p144 = pnand %p142, %p143
      %p145 = pneg %p144
      // Predicated region
      $region9: #{img2sphere_forward.1} parent=5 // pred_check
        _
      $region10: #{img2sphere_forward.1} parent=5 // pred_check_branch
        %147 = sbr.rel (%p144) target = $region12
      $region11: #{img2sphere_forward.1} parent=5 // pred_region
        %s148 = ssub.s32 %s12, 1
      $region12: #{img2sphere_forward.1} parent=5 // pred_fallthru
        _
      %p149 = scmp.lt.s32.totalorder %s12, 2
      // Predicated region
      $region13: #{img2sphere_forward.1} parent=5 // pred_check
        %p150 = pneg %p149
      $region14: #{img2sphere_forward.1} parent=5 // pred_check_branch
        %152 = sbr.rel (%p150) target = $region16
      $region15: #{img2sphere_forward.1} parent=5 // pred_region
        // Predicated region
        $region17: #{img2sphere_forward.1} parent=15 // pred_check
          %p153 = pneg %p46
        $region18: #{img2sphere_forward.1} parent=15 // pred_check_branch
          %155 = sbr.rel (%p153) target = $region20
        $region19: #{img2sphere_forward.1} parent=15 // pred_region
          %s156 = smul.u32 2, %s20
          %p157 = scmp.lt.s32.totalorder %s19, 1
          %s158 = scalar_select %p157, %s19, 1
          %p159 = scmp.lt.s32.totalorder %s156, 1
          %s160 = scalar_select %p159, %s156, 1
          %s161 = smul.addr %s158, 2
          %s162 = sadd.s32 %s160, %s161
          %s163 = smul.addr %s162, 8
          %s164 = scalar_lea.vmem %s0, %s163
          %s165 = smul.u32 2, %s20
        $region20: #{img2sphere_forward.1} parent=15 // pred_fallthru
          _
        // Predicated region
        $region21: #{img2sphere_forward.1} parent=15 // pred_check
          %p166 = pneg %p74
        $region22: #{img2sphere_forward.1} parent=15 // pred_check_branch
          %168 = sbr.rel (%p166) target = $region24
        $region23: #{img2sphere_forward.1} parent=15 // pred_region
          %s169 = smul.u32 2, %s20
          %p170 = scmp.lt.s32.totalorder %s19, 1
          %s171 = scalar_select %p170, %s19, 1
          %p172 = scmp.lt.s32.totalorder %s169, 1
          %s173 = scalar_select %p172, %s169, 1
          %s174 = smul.addr %s171, 8
          %s175 = sadd.s32 %s173, %s174
          %s176 = smul.addr %s175, 4
          %s177 = scalar_lea.vmem %s1, %s176
          %s178 = smul.u32 2, %s20
        $region24: #{img2sphere_forward.1} parent=15 // pred_fallthru
          _
        // Predicated region
        $region25: #{img2sphere_forward.1} parent=15 // pred_check
          %p179 = pneg %p100
        $region26: #{img2sphere_forward.1} parent=15 // pred_check_branch
          %181 = sbr.rel (%p179) target = $region28
        $region27: #{img2sphere_forward.1} parent=15 // pred_region
          %p182 = scmp.lt.s32.totalorder %s19, 1
          %s183 = scalar_select %p182, %s19, 1
          %s184 = smul.addr %s183, 4
          %s185 = scalar_lea.vmem %s2, %s184
        $region28: #{img2sphere_forward.1} parent=15 // pred_fallthru
          _
      $region16: #{img2sphere_forward.1} parent=5 // pred_fallthru
        _
      %p186 = scmp.le.s32.totalorder 1, %s12
      %p187 = scmp.lt.s32.totalorder %s12, 3
      %p188 = pnand %p186, %p187
      %p189 = pneg %p188
      // Predicated region
      $region29: #{img2sphere_forward.1} parent=5 // pred_check
        _
      $region30: #{img2sphere_forward.1} parent=5 // pred_check_branch
        %191 = sbr.rel (%p188) target = $region32
      $region31: #{img2sphere_forward.1} parent=5 // pred_region
        %s192 = ssub.s32 %s12, 1
        %s193 = smul.u32 2, %s22
        %p194 = scmp.lt.s32.totalorder %s21, 1
        %s195 = scalar_select %p194, %s21, 1
        %p196 = scmp.lt.s32.totalorder %s193, 1
        %s197 = scalar_select %p196, %s193, 1
        %s198 = smul.addr %s195, 2
        %s199 = sadd.s32 %s197, %s198
        %s200 = smul.addr %s199, 8
        %s201 = scalar_lea.vmem %s0, %s200
        %p202 = pneg %p52
        %p203 = pneg %p49
        %s204 = smul.u32 2, %s22
        %p205 = scmp.lt.s32.totalorder %s21, 1
        %s206 = scalar_select %p205, %s21, 1
        %p207 = scmp.lt.s32.totalorder %s204, 1
        %s208 = scalar_select %p207, %s204, 1
        %s209 = smul.addr %s206, 8
        %s210 = sadd.s32 %s208, %s209
        %s211 = smul.addr %s210, 4
        %s212 = scalar_lea.vmem %s1, %s211
        %p213 = pneg %p80
        %p214 = pneg %p77
        %p215 = scmp.lt.s32.totalorder %s21, 1
        %s216 = scalar_select %p215, %s21, 1
        %s217 = smul.addr %s216, 4
        %s218 = scalar_lea.vmem %s2, %s217
        %p219 = pneg %p106
        %p220 = pneg %p103
        %p221 = pneg %p134
        %p222 = pneg %p131
        %s223 = sand.u32 %s121, 1
        %s224 = scalar_lea.sflag [#allocation3], %s223
        %s225 = sand.u32 %s121, 1
        %s226 = smul.addr %s225, 8
        %s227 = scalar_lea.vmem [#allocation2], %s226
        %s228 = smul.u32 2, %s22
        %p229 = scmp.lt.s32.totalorder %s21, 1
        %s230 = scalar_select %p229, %s21, 1
        %p231 = scmp.lt.s32.totalorder %s228, 1
        %s232 = scalar_select %p231, %s228, 1
        %s233 = smul.addr %s230, 2
        %s234 = sadd.s32 %s232, %s233
        %s235 = smul.addr %s234, 8
        %s236 = scalar_lea.vmem %s0, %s235
        %s237 = smul.u32 2, %s22
        %s238 = smul.u32 2, %s22
        %p239 = scmp.lt.s32.totalorder %s21, 1
        %s240 = scalar_select %p239, %s21, 1
        %p241 = scmp.lt.s32.totalorder %s238, 1
        %s242 = scalar_select %p241, %s238, 1
        %s243 = smul.addr %s240, 8
        %s244 = sadd.s32 %s242, %s243
        %s245 = smul.addr %s244, 4
        %s246 = scalar_lea.vmem %s1, %s245
        %s247 = smul.u32 2, %s22
        %p248 = scmp.lt.s32.totalorder %s21, 1
        %s249 = scalar_select %p248, %s21, 1
        %s250 = smul.addr %s249, 4
        %s251 = scalar_lea.vmem %s2, %s250
        %s252 = smul.u32 2, %s22
        %v253 = vld [vmem:[%s236] sm:$0xff]
        %v254 = vld [vmem:[%s236 + $0x8] sm:$0xff]
        %v255 = vld [vmem:[%s246] sm:$0x77]
        %v256 = vld [vmem:[%s246 + $0x8] sm:$0x77]
        %v257 = vld [vmem:[%s246 + $0x10] sm:$0x77]
        %v258 = vld [vmem:[%s246 + $0x18] sm:$0x77]
        %v259 = vld [vmem:[%s251] sm:$0xf]
        %v264 = vcombine.high %v255, %v255
        %v265 = vcombine.high %v256, %v256
        %v266 = vcombine.high %v257, %v257
        %v267 = vcombine.high %v258, %v258
        %vm272 = vcmask 1042432
        %v273 = vsel %vm272, %v255, 0.0
        %v274 = vrot.slane %v273, 4
        %v275 = vadd.f32 %v273, %v274
        %v276 = vrot.slane %v275, 2
        %v277 = vadd.f32 %v275, %v276
        %v278 = vrot.slane %v277, 1
        %v279 = vadd.f32 %v277, %v278
        %v280 = vsel %vm272, %v264, 0.0
        %v281 = vrot.slane %v280, 4
        %v282 = vadd.f32 %v280, %v281
        %v283 = vrot.slane %v282, 2
        %v284 = vadd.f32 %v282, %v283
        %v285 = vrot.slane %v284, 1
        %v286 = vadd.f32 %v284, %v285
        %v287 = vsel %vm272, %v256, 0.0
        %v288 = vrot.slane %v287, 4
        %v289 = vadd.f32 %v287, %v288
        %v290 = vrot.slane %v289, 2
        %v291 = vadd.f32 %v289, %v290
        %v292 = vrot.slane %v291, 1
        %v293 = vadd.f32 %v291, %v292
        %v294 = vsel %vm272, %v265, 0.0
        %v295 = vrot.slane %v294, 4
        %v296 = vadd.f32 %v294, %v295
        %v297 = vrot.slane %v296, 2
        %v298 = vadd.f32 %v296, %v297
        %v299 = vrot.slane %v298, 1
        %v300 = vadd.f32 %v298, %v299
        %v301 = vsel %vm272, %v257, 0.0
        %v302 = vrot.slane %v301, 4
        %v303 = vadd.f32 %v301, %v302
        %v304 = vrot.slane %v303, 2
        %v305 = vadd.f32 %v303, %v304
        %v306 = vrot.slane %v305, 1
        %v307 = vadd.f32 %v305, %v306
        %v308 = vsel %vm272, %v266, 0.0
        %v309 = vrot.slane %v308, 4
        %v310 = vadd.f32 %v308, %v309
        %v311 = vrot.slane %v310, 2
        %v312 = vadd.f32 %v310, %v311
        %v313 = vrot.slane %v312, 1
        %v314 = vadd.f32 %v312, %v313
        %v315 = vsel %vm272, %v258, 0.0
        %v316 = vrot.slane %v315, 4
        %v317 = vadd.f32 %v315, %v316
        %v318 = vrot.slane %v317, 2
        %v319 = vadd.f32 %v317, %v318
        %v320 = vrot.slane %v319, 1
        %v321 = vadd.f32 %v319, %v320
        %v322 = vsel %vm272, %v267, 0.0
        %v323 = vrot.slane %v322, 4
        %v324 = vadd.f32 %v322, %v323
        %v325 = vrot.slane %v324, 2
        %v326 = vadd.f32 %v324, %v325
        %v327 = vrot.slane %v326, 1
        %v328 = vadd.f32 %v326, %v327
        %v329 = vand.u32 2147483647, %v279
        %v330 = vand.u32 2147483647, %v286
        %v331 = vand.u32 2147483647, %v293
        %v332 = vand.u32 2147483647, %v300
        %v333 = vand.u32 2147483647, %v307
        %v334 = vand.u32 2147483647, %v314
        %v335 = vand.u32 2147483647, %v321
        %v336 = vand.u32 2147483647, %v328
        %vm337 = vcmp.lt.f32.partialorder %v329, 1e-06
        %vm338 = vcmp.lt.f32.partialorder %v330, 1e-06
        %vm339 = vcmp.lt.f32.partialorder %v331, 1e-06
        %vm340 = vcmp.lt.f32.partialorder %v332, 1e-06
        %vm341 = vcmp.lt.f32.partialorder %v333, 1e-06
        %vm342 = vcmp.lt.f32.partialorder %v334, 1e-06
        %vm343 = vcmp.lt.f32.partialorder %v335, 1e-06
        %vm344 = vcmp.lt.f32.partialorder %v336, 1e-06
        %vm345 = vcmp.lt.f32.partialorder %v279, 0.0
        %vm346 = vcmp.lt.f32.partialorder %v286, 0.0
        %vm347 = vcmp.lt.f32.partialorder %v293, 0.0
        %vm348 = vcmp.lt.f32.partialorder %v300, 0.0
        %vm349 = vcmp.lt.f32.partialorder %v307, 0.0
        %vm350 = vcmp.lt.f32.partialorder %v314, 0.0
        %vm351 = vcmp.lt.f32.partialorder %v321, 0.0
        %vm352 = vcmp.lt.f32.partialorder %v328, 0.0
        %v353 = vsel %vm345, -1e-06, 1e-06
        %v354 = vsel %vm346, -1e-06, 1e-06
        %v355 = vsel %vm347, -1e-06, 1e-06
        %v356 = vsel %vm348, -1e-06, 1e-06
        %v357 = vsel %vm349, -1e-06, 1e-06
        %v358 = vsel %vm350, -1e-06, 1e-06
        %v359 = vsel %vm351, -1e-06, 1e-06
        %v360 = vsel %vm352, -1e-06, 1e-06
        %v361 = vsel %vm337, %v353, %v279
        %v362 = vsel %vm338, %v354, %v286
        %v363 = vsel %vm339, %v355, %v293
        %v364 = vsel %vm340, %v356, %v300
        %v365 = vsel %vm341, %v357, %v307
        %v366 = vsel %vm342, %v358, %v314
        %v367 = vsel %vm343, %v359, %v321
        %v368 = vsel %vm344, %v360, %v328
        %370 = vset.pattern.permute.xlu0 0
        %371 = vperm.xlu0 %370, %v259
        %v372 = vpop.permute.xlu0 %371
        %vm382 = vcmask 1041409
        %v383 = vsel %vm382, %v363, %v361
        %vm384 = vcmask 1042434
        %v385 = vsel %vm384, %v365, %v383
        %vm386 = vcmask 1043459
        %v387 = vsel %vm386, %v367, %v385
        %v388 = vsel %vm382, %v364, %v362
        %v389 = vsel %vm384, %v366, %v388
        %v390 = vsel %vm386, %v368, %v389
        %v393 = vrcp.pop %v387
        %v394 = vmul.f32 %v372, %v393
        %v395 = vrcp.pop %v390
        %v396 = vmul.f32 %v372, %v395
        %v397 = vsub.f32 %v394, 0.5
        %v398 = vsub.f32 %v396, 0.5
        %v399 = vand.u32 2147483647, %v397
        %v400 = vand.u32 2147483647, %v398
        %v401 = vmul.f32 %v399, 2.0
        %v402 = vmul.f32 %v400, 2.0
        %v403 = vsub.f32 1.0, %v401
        %v404 = vsub.f32 1.0, %v402
        %v405 = vmax.f32 %v403, 0.0
        %v406 = vmax.f32 %v404, 0.0
        %v407 = vlaneseq
        %v408 = vshrl.u32 %v407, 7
        %v409 = vsub.s32 0, %v408
        %v410 = vrot.slane %v253, %v409
        %v411 = vlaneseq
        %v412 = vshrl.u32 %v411, 7
        %v413 = vsub.s32 0, %v412
        %v414 = vrot.slane %v254, %v413
        %v415 = vmul.f32 %v405, %v410
        %v416 = vmul.f32 %v406, %v414
        %v417 = vadd.f32 %v415, 0.0
        %v418 = vadd.f32 %v416, 0.0
        %v419 = vsub.f32 %v394, 1.0
        %v420 = vsub.f32 %v396, 1.0
        %v421 = vand.u32 2147483647, %v419
        %v422 = vand.u32 2147483647, %v420
        %v423 = vmul.f32 %v421, 2.0
        %v424 = vmul.f32 %v422, 2.0
        %v425 = vsub.f32 1.0, %v423
        %v426 = vsub.f32 1.0, %v424
        %v427 = vmax.f32 %v425, 0.0
        %v428 = vmax.f32 %v426, 0.0
        %v429 = vlaneseq
        %v430 = vshrl.u32 %v429, 7
        %v431 = vsub.s32 1, %v430
        %v432 = vrot.slane %v253, %v431
        %v433 = vlaneseq
        %v434 = vshrl.u32 %v433, 7
        %v435 = vsub.s32 1, %v434
        %v436 = vrot.slane %v254, %v435
        %v437 = vmul.f32 %v427, %v432
        %v438 = vmul.f32 %v428, %v436
        %v439 = vadd.f32 %v417, %v437
        %v440 = vadd.f32 %v418, %v438
        %v441 = vsub.f32 %v394, 1.5
        %v442 = vsub.f32 %v396, 1.5
        %v443 = vand.u32 2147483647, %v441
        %v444 = vand.u32 2147483647, %v442
        %v445 = vmul.f32 %v443, 2.0
        %v446 = vmul.f32 %v444, 2.0
        %v447 = vsub.f32 1.0, %v445
        %v448 = vsub.f32 1.0, %v446
        %v449 = vmax.f32 %v447, 0.0
        %v450 = vmax.f32 %v448, 0.0
        %v451 = vlaneseq
        %v452 = vshrl.u32 %v451, 7
        %v453 = vsub.s32 2, %v452
        %v454 = vrot.slane %v253, %v453
        %v455 = vlaneseq
        %v456 = vshrl.u32 %v455, 7
        %v457 = vsub.s32 2, %v456
        %v458 = vrot.slane %v254, %v457
        %v459 = vmul.f32 %v449, %v454
        %v460 = vmul.f32 %v450, %v458
        %v461 = vadd.f32 %v439, %v459
        %v462 = vadd.f32 %v440, %v460
        %v463 = vsub.f32 %v394, 2.0
        %v464 = vsub.f32 %v396, 2.0
        %v465 = vand.u32 2147483647, %v463
        %v466 = vand.u32 2147483647, %v464
        %v467 = vmul.f32 %v465, 2.0
        %v468 = vmul.f32 %v466, 2.0
        %v469 = vsub.f32 1.0, %v467
        %v470 = vsub.f32 1.0, %v468
        %v471 = vmax.f32 %v469, 0.0
        %v472 = vmax.f32 %v470, 0.0
        %v473 = vlaneseq
        %v474 = vshrl.u32 %v473, 7
        %v475 = vsub.s32 3, %v474
        %v476 = vrot.slane %v253, %v475
        %v477 = vlaneseq
        %v478 = vshrl.u32 %v477, 7
        %v479 = vsub.s32 3, %v478
        %v480 = vrot.slane %v254, %v479
        %v481 = vmul.f32 %v471, %v476
        %v482 = vmul.f32 %v472, %v480
        %v483 = vadd.f32 %v461, %v481
        %v484 = vadd.f32 %v462, %v482
        %v485 = vsub.f32 %v394, 2.5
        %v486 = vsub.f32 %v396, 2.5
        %v487 = vand.u32 2147483647, %v485
        %v488 = vand.u32 2147483647, %v486
        %v489 = vmul.f32 %v487, 2.0
        %v490 = vmul.f32 %v488, 2.0
        %v491 = vsub.f32 1.0, %v489
        %v492 = vsub.f32 1.0, %v490
        %v493 = vmax.f32 %v491, 0.0
        %v494 = vmax.f32 %v492, 0.0
        %v495 = vlaneseq
        %v496 = vshrl.u32 %v495, 7
        %v497 = vsub.s32 4, %v496
        %v498 = vrot.slane %v253, %v497
        %v499 = vlaneseq
        %v500 = vshrl.u32 %v499, 7
        %v501 = vsub.s32 4, %v500
        %v502 = vrot.slane %v254, %v501
        %v503 = vmul.f32 %v493, %v498
        %v504 = vmul.f32 %v494, %v502
        %v505 = vadd.f32 %v483, %v503
        %v506 = vadd.f32 %v484, %v504
        %v507 = vsub.f32 %v394, 3.0
        %v508 = vsub.f32 %v396, 3.0
        %v509 = vand.u32 2147483647, %v507
        %v510 = vand.u32 2147483647, %v508
        %v511 = vmul.f32 %v509, 2.0
        %v512 = vmul.f32 %v510, 2.0
        %v513 = vsub.f32 1.0, %v511
        %v514 = vsub.f32 1.0, %v512
        %v515 = vmax.f32 %v513, 0.0
        %v516 = vmax.f32 %v514, 0.0
        %v517 = vlaneseq
        %v518 = vshrl.u32 %v517, 7
        %v519 = vsub.s32 5, %v518
        %v520 = vrot.slane %v253, %v519
        %v521 = vlaneseq
        %v522 = vshrl.u32 %v521, 7
        %v523 = vsub.s32 5, %v522
        %v524 = vrot.slane %v254, %v523
        %v525 = vmul.f32 %v515, %v520
        %v526 = vmul.f32 %v516, %v524
        %v527 = vadd.f32 %v505, %v525
        %v528 = vadd.f32 %v506, %v526
        %v529 = vsub.f32 %v394, 3.5
        %v530 = vsub.f32 %v396, 3.5
        %v531 = vand.u32 2147483647, %v529
        %v532 = vand.u32 2147483647, %v530
        %v533 = vmul.f32 %v531, 2.0
        %v534 = vmul.f32 %v532, 2.0
        %v535 = vsub.f32 1.0, %v533
        %v536 = vsub.f32 1.0, %v534
        %v537 = vmax.f32 %v535, 0.0
        %v538 = vmax.f32 %v536, 0.0
        %v539 = vlaneseq
        %v540 = vshrl.u32 %v539, 7
        %v541 = vsub.s32 6, %v540
        %v542 = vrot.slane %v253, %v541
        %v543 = vlaneseq
        %v544 = vshrl.u32 %v543, 7
        %v545 = vsub.s32 6, %v544
        %v546 = vrot.slane %v254, %v545
        %v547 = vmul.f32 %v537, %v542
        %v548 = vmul.f32 %v538, %v546
        %v549 = vadd.f32 %v527, %v547
        %v550 = vadd.f32 %v528, %v548
        %v551 = vsub.f32 %v394, 4.0
        %v552 = vsub.f32 %v396, 4.0
        %v553 = vand.u32 2147483647, %v551
        %v554 = vand.u32 2147483647, %v552
        %v555 = vmul.f32 %v553, 2.0
        %v556 = vmul.f32 %v554, 2.0
        %v557 = vsub.f32 1.0, %v555
        %v558 = vsub.f32 1.0, %v556
        %v559 = vmax.f32 %v557, 0.0
        %v560 = vmax.f32 %v558, 0.0
        %v561 = vlaneseq
        %v562 = vshrl.u32 %v561, 7
        %v563 = vsub.s32 7, %v562
        %v564 = vrot.slane %v253, %v563
        %v565 = vlaneseq
        %v566 = vshrl.u32 %v565, 7
        %v567 = vsub.s32 7, %v566
        %v568 = vrot.slane %v254, %v567
        %v569 = vmul.f32 %v559, %v564
        %v570 = vmul.f32 %v560, %v568
        %v571 = vadd.f32 %v549, %v569
        %v572 = vadd.f32 %v550, %v570
        %v575 = vcombine.low %v571, %v572
        %577 = vst [vmem:[%s227] sm:$0xff] %v575
        %s578 = sand.u32 %s121, 1
        %s579 = scalar_lea.sflag [#allocation3], %s578
        %s580 = sand.u32 %s121, 1
        %s581 = smul.addr %s580, 8
        %s582 = scalar_lea.vmem [#allocation2], %s581
        // Predicated region
        $region33: #{img2sphere_forward.1} parent=31 // pred_check
          %p583 = pneg %p131
        $region34: #{img2sphere_forward.1} parent=31 // pred_check_branch
          %585 = sbr.rel (%p583) target = $region36
        $region35: #{img2sphere_forward.1} parent=31 // pred_region
          %s586 = smul.u32 2, %s22
          %s588 = ssub.s32 128, 128
          %589 = vsyncadd %s579, %s588
          %s590 = smul.addr %s21, 2
          %s591 = sadd.s32 %s586, %s590
          %s592 = smul.addr %s591, 64
          %s593 = scalar_lea.hbm %s3, %s592
          %s595 = sshll.u32 %s582, 4
          %s596 = int_to_ptr.vmem [resolvable:$true] %s595
          %598 = dma.vmem_to_hbm [thread:$0]  %s596, 128, %s593, %s579
        $region36: #{img2sphere_forward.1} parent=31 // pred_fallthru
          _
      $region32: #{img2sphere_forward.1} parent=5 // pred_fallthru
        _
      %p599 = scmp.le.s32.totalorder 2, %s12
      // Predicated region
      $region37: #{img2sphere_forward.1} parent=5 // pred_check
        %p600 = pneg %p599
      $region38: #{img2sphere_forward.1} parent=5 // pred_check_branch
        %602 = sbr.rel (%p600) target = $region40
      $region39: #{img2sphere_forward.1} parent=5 // pred_region
        %s603 = ssub.s32 %s12, 2
        // Predicated region
        $region41: #{img2sphere_forward.1} parent=39 // pred_check
          %p604 = pneg %p137
        $region42: #{img2sphere_forward.1} parent=39 // pred_check_branch
          %606 = sbr.rel (%p604) target = $region44
        $region43: #{img2sphere_forward.1} parent=39 // pred_region
          %s607 = sand.u32 %s122, 1
          %s608 = scalar_lea.sflag [#allocation3], %s607
          %s609 = sand.u32 %s122, 1
          %s610 = smul.addr %s609, 8
          %s611 = scalar_lea.vmem [#allocation2], %s610
          %612 = dma.done %s608, 128
        $region44: #{img2sphere_forward.1} parent=39 // pred_fallthru
          _
      $region40: #{img2sphere_forward.1} parent=5 // pred_fallthru
        _
    $region6: #{img2sphere_forward.1} parent=1 // loop_footer
      %s16 = sadd.s32 1, %s12
    $region7: #{img2sphere_forward.1} parent=1 // loop_footer_branch
      %11 = sbr.rel target = $region3
    $region8: #{img2sphere_forward.1} parent=1 // loop_exit
      _
    %613 = vsyncpa [#allocation3], 1
    %s614 = scalar_lea.sflag [#allocation3], 1
    %615 = vsyncpa %s614, 1

</llo_original>
